<compile_context>
chip_gen: v5e
topology: v5e:2x2
jax: 0.10.0
libtpu: 0.0.40
codegen_flags: <defaults>
</compile_context>

<pallas_src>
import functools
import math

import jax
import jax.numpy as jnp
import numpy as np
from jax.experimental import pallas as pl
from jax.experimental.pallas import tpu as pltpu


# ---------------------------------------------------------------------------
# Host-side (numpy) interpolation matrices with torch F.interpolate semantics.
# Cached so repeated calls reuse baked constants (no per-call HBM weight build).
# ---------------------------------------------------------------------------
@functools.lru_cache(maxsize=128)
def _interp_matrix(out_size, in_size, mode, align_corners, scale):
    """(out_size, in_size) f32 1-D interpolation matrix.  `scale` is the
    requested upsample factor; PyTorch uses 1/scale (not in/out) for source
    coordinates when a scale_factor is supplied."""
    dst = np.arange(out_size, dtype=np.float64)
    inv = (1.0 / float(scale)) if scale else (in_size / out_size)

    if mode == "nearest":
        src = np.floor(dst * inv).astype(np.int64)
        src = np.clip(src, 0, in_size - 1)
        m = np.zeros((out_size, in_size), np.float32)
        m[np.arange(out_size), src] = 1.0
        return m

    if mode != "bilinear":
        raise NotImplementedError(f"mode={mode}")
        # TODO(synk): 'bicubic' / 'area' / 'trilinear' modes not implemented.

    if align_corners:
        if out_size == 1:
            src = np.zeros_like(dst)
        else:
            src = dst * ((in_size - 1) / (out_size - 1))
    else:
        src = (dst + 0.5) * inv - 0.5
        src = np.maximum(src, 0.0)            # PyTorch clamps negative coords

    i0 = np.clip(np.floor(src).astype(np.int64), 0, in_size - 1)
    i1 = np.clip(i0 + 1, 0, in_size - 1)
    w1 = (src - i0).astype(np.float32)
    w0 = (1.0 - w1).astype(np.float32)
    m = np.zeros((out_size, in_size), np.float32)
    np.add.at(m, (np.arange(out_size), i0), w0)
    np.add.at(m, (np.arange(out_size), i1), w1)
    return m


@functools.lru_cache(maxsize=32)
def _kron_matrix(H, W, Ho, Wo, mode, align_corners, sh, sw):
    """(H*W, Ho*Wo) fused weight so that out_flat = x_flat @ kron(Wh, Ww)^T."""
    wh = _interp_matrix(Ho, H, mode, align_corners, sh)      # (Ho, H)
    ww = _interp_matrix(Wo, W, mode, align_corners, sw)      # (Wo, W)
    return np.einsum("oh,pw->hwop", wh, ww).reshape(H * W, Ho * Wo)


# ---------------------------------------------------------------------------
# Per-generation constants (rooflines only gate fused-vs-separable; VMEM
# numbers size the blocks).  Conservative fallbacks when queries fail.
# ---------------------------------------------------------------------------
@functools.lru_cache(maxsize=1)
def _chip_params():
    kind = ""
    try:
        kind = jax.devices()[0].device_kind.lower()
    except Exception:
        pass
    vmem_cap = None
    try:
        vmem_cap = int(pltpu.get_tpu_info().vmem_capacity_bytes)
    except Exception:
        pass

    # Rough per-TensorCore peak FLOP/s and HBM bytes/s.
    if "v5 lite" in kind or "v5e" in kind:
        mxu_m, peak_bf16, peak_f32, hbm_bw = 128, 197e12, 49e12, 0.80e12
    elif "v5" in kind:                                        # v5p
        mxu_m, peak_bf16, peak_f32, hbm_bw = 128, 459e12, 115e12, 2.70e12
    elif "v4" in kind or "v3" in kind or "v2" in kind:
        mxu_m, peak_bf16, peak_f32, hbm_bw = 128, 275e12, 69e12, 1.20e12
    elif "v6" in kind:
        mxu_m, peak_bf16, peak_f32, hbm_bw = 256, 918e12, 230e12, 1.30e12
    elif "7" in kind:
        mxu_m, peak_bf16, peak_f32, hbm_bw = 256, 996e12, 250e12, 3.20e12
    else:
        mxu_m, peak_bf16, peak_f32, hbm_bw = 256, 197e12, 49e12, 0.80e12

    if vmem_cap is None:
        vmem_cap = 64 * 1024 * 1024                 # assume smallest (v7x/TC)
    if vmem_cap >= 96 * 1024 * 1024:                # v2..v6: 128 MiB physical
        vmem_limit = 64 * 1024 * 1024
    else:                                           # v7x: 64 MiB per TC
        vmem_limit = 48 * 1024 * 1024
    vmem_budget = (vmem_limit * 3) // 4             # headroom for Mosaic scratch

    return dict(kind=kind, mxu_m=mxu_m, peak_bf16=peak_bf16, peak_f32=peak_f32,
                hbm_bw=hbm_bw, vmem_limit=vmem_limit, vmem_budget=vmem_budget)


# ---------------------------------------------------------------------------
# Kernels
# ---------------------------------------------------------------------------
def _fused_kernel(x_ref, k_ref, o_ref):
    # x_ref: (TB, H*W)   k_ref: (H*W, Ho*Wo)   o_ref: (TB, Ho*Wo)
    # One MXU matmul; output store is lane-dense (last dim = Ho*Wo).
    o_ref[...] = jnp.dot(
        x_ref[...], k_ref[...], preferred_element_type=jnp.float32
    ).astype(o_ref.dtype)


def _separable_kernel(x_ref, wh_ref, wwT_ref, o_ref, *, merge_w_pass):
    # x_ref: (TB, H, W)  wh_ref: (Ho, H) f32  wwT_ref: (W, Wo)  o_ref: (TB, Ho, Wo)
    tb, H, W = x_ref.shape
    Wo = wwT_ref.shape[-1]
    x = x_ref[...]
    if merge_w_pass:
        # W-pass as ONE 2-D matmul: (tb*H, W) @ (W, Wo).  Merging (tb, H) is a
        # free relayout (lane dim W unchanged, H a multiple of 8) and gives the
        # MXU a full M = tb*H instead of per-channel (H, W) matmuls.
        t = jax.lax.dot_general(
            x.reshape(tb * H, W), wwT_ref[...],
            (((1,), (0,)), ((), ())),
            preferred_element_type=jnp.float32,
        ).reshape(tb, H, Wo)
    else:
        # H not sublane-aligned: keep the (known-good) batched W-pass.
        wwT_b = jnp.broadcast_to(wwT_ref[...][None], (tb, W, Wo))
        t = jnp.einsum("bhw,bwo->bho", x, wwT_b,
                       preferred_element_type=jnp.float32)
    # H-pass: batched (Ho, H) @ (H, Wo) per channel; wh kept f32 (precision).
    # TODO(synk): a fully merged (2-D) H-pass needs a batched minor-dim
    # transpose; kept as a broadcast batched matmul for guaranteed lowering.
    wh_b = jnp.broadcast_to(wh_ref[...][None], (tb,) + wh_ref.shape)
    out = jnp.einsum("boh,bhw->bow", wh_b, t,
                     preferred_element_type=jnp.float32)
    o_ref[...] = out.astype(o_ref.dtype)


# ---------------------------------------------------------------------------
# Block sizing & spec helpers
# ---------------------------------------------------------------------------
def _choose_tb(n_rows, per_row_bytes, budget_bytes, *, sublane=8, min_m=256,
               target_steps=4):
    """Rows (flattened B*C channels) per grid step."""
    tb = max(1, int(budget_bytes) // max(int(per_row_bytes), 1))
    tb = min(tb, n_rows, 2048)
    if tb >= n_rows:
        # Everything fits in one block: split only if each piece still fills
        # the MXU M dimension, targeting >= target_steps grid steps so both
        # v7x TensorCores keep their DMA pipelines (double-buffering) busy.
        if n_rows >= target_steps * min_m:
            tb = -(-n_rows // target_steps)
        elif n_rows >= 2 * min_m:
            tb = -(-n_rows // 2)
        else:
            return n_rows
    tb = max(sublane, (tb // sublane) * sublane)
    return min(tb, n_rows)


def _invariant_spec(block_shape, index_map):
    """BlockSpec for a grid-invariant operand, single-buffered when supported.
    Returns (spec, assumed_buffer_count) for VMEM budgeting."""
    buffered = getattr(pl, "Buffered", None)
    if buffered is not None:
        try:
            return pl.BlockSpec(block_shape, index_map,
                                pipeline_mode=buffered(1)), 1
        except TypeError:
            pass
    return pl.BlockSpec(block_shape, index_map), 2


# ---------------------------------------------------------------------------
# Public wrapper — equivalent of Upsample(scale_factor, mode, align_corners)(x)
# ---------------------------------------------------------------------------
@functools.partial(
    jax.jit,
    static_argnames=("scale_factor", "mode", "align_corners", "force_separable"),
)
def upsample(x, *, scale_factor=2, mode="bilinear", align_corners=False,
             force_separable=False):
    """x: (B, C, H, W) NCHW float. Returns (B, C, H_out, W_out), same dtype."""
    B, C, H, W = x.shape
    if isinstance(scale_factor, (tuple, list)):
        sf_h, sf_w = float(scale_factor[0]), float(scale_factor[1])
    else:
        sf_h = sf_w = float(scale_factor)
    H_out = int(math.floor(H * sf_h))      # PyTorch floors the output size
    W_out = int(math.floor(W * sf_w))

    orig_dtype = x.dtype
    if x.dtype == jnp.bfloat16:
        compute_dtype = jnp.bfloat16       # bf16 operands, f32 accumulation
    else:
        compute_dtype = jnp.float32
        if x.dtype != jnp.float32:
            x = x.astype(jnp.float32)

    chip = _chip_params()
    xb = jnp.dtype(compute_dtype).itemsize
    ob = jnp.dtype(orig_dtype).itemsize
    sublane = max(8, 32 // xb)             # 8 for f32, 16 for bf16
    N = B * C
    vmem_budget = chip["vmem_budget"]
    vmem_limit = chip["vmem_limit"]

    # ---- fused-vs-separable gate (per-generation roofline) -------------------
    fused_weight_bytes = H * W * H_out * W_out * xb
    fused_flops = 2.0 * N * (H * W) * (H_out * W_out)
    data_bytes = N * (H * W) * xb + N * (H_out * W_out) * ob
    peak = chip["peak_bf16"] if compute_dtype == jnp.bfloat16 else chip["peak_f32"]
    t_mxu = fused_flops / peak
    t_hbm = (data_bytes + fused_weight_bytes) / chip["hbm_bw"]
    weight_cap = min(vmem_budget // 3, 12 * 1024 * 1024)
    use_fused = (
        mode == "bilinear"                 # nearest never needs the kron weight
        and not force_separable
        and fused_weight_bytes <= weight_cap
        and t_mxu <= 1.25 * t_hbm          # stay (roughly) HBM-bound
    )

    if use_fused:
        # kron(Wh, Ww)^T as a baked constant: one lane-dense matmul per block.
        kmat = jnp.asarray(
            _kron_matrix(H, W, H_out, W_out, mode, align_corners, sf_h, sf_w),
            dtype=compute_dtype)
        x_flat = x.reshape(N, H * W)

        k_spec, k_bufs = _invariant_spec((H * W, H_out * W_out),
                                         lambda i: (0, 0))
        per_row = (2 * H * W * xb             # input block (double-buffered)
                   + 2 * H_out * W_out * ob   # output block (double-buffered)
                   + 4 * H_out * W_out)       # f32 matmul result before cast
        tb = _choose_tb(N, per_row, vmem_budget - k_bufs * fused_weight_bytes,
                        sublane=sublane, min_m=chip["mxu_m"])
        grid = (pl.cdiv(N, tb),)

        cost = pl.CostEstimate(
            flops=int(fused_flops), transcendentals=0,
            bytes_accessed=int(data_bytes + fused_weight_bytes))

        out_flat = pl.pallas_call(
            _fused_kernel,
            out_shape=jax.ShapeDtypeStruct((N, H_out * W_out), orig_dtype),
            grid_spec=pltpu.PrefetchScalarGridSpec(
                num_scalar_prefetch=0,
                grid=grid,
                in_specs=[
                    pl.BlockSpec((tb, H * W), lambda i: (i, 0)),
                    k_spec,
                ],
                out_specs=pl.BlockSpec((tb, H_out * W_out), lambda i: (i, 0)),
            ),
            compiler_params=pltpu.CompilerParams(
                dimension_semantics=("parallel",),
                vmem_limit_bytes=vmem_limit,
            ),
            cost_estimate=cost,
        )(x_flat, kmat)
        return out_flat.reshape(B, C, H_out, W_out)

    # ------------- separable path (large spatial sizes / nearest) -------------
    wh = jnp.asarray(_interp_matrix(H_out, H, mode, align_corners, sf_h),
                     dtype=jnp.float32)                 # (Ho, H), kept f32
    wwT = jnp.asarray(_interp_matrix(W_out, W, mode, align_corners, sf_w).T,
                      dtype=compute_dtype)              # (W, Wo)
    x3 = x.reshape(N, H, W)
    merge_w_pass = (H % 8 == 0)

    wh_spec, wh_bufs = _invariant_spec((H_out, H), lambda i: (0, 0))
    ww_spec, ww_bufs = _invariant_spec((W, W_out), lambda i: (0, 0))
    weight_bytes = wh_bufs * H_out * H * 4 + ww_bufs * W * W_out * xb

    per_row = (2 * H * W * xb + 2 * H_out * W_out * ob
               + 4 * H * W_out + 4 * H_out * W_out      # f32 intermediates
               + 4 * H_out * H)                         # broadcast wh (f32)
    if not merge_w_pass:
        per_row += W * W_out * xb                       # broadcast wwT fallback
    tb = _choose_tb(N, per_row, vmem_budget - weight_bytes,
                    sublane=sublane, min_m=chip["mxu_m"])
    grid = (pl.cdiv(N, tb),)

    sep_flops = 2.0 * N * (H * W * W_out + H_out * H * W_out)
    cost = pl.CostEstimate(
        flops=int(sep_flops), transcendentals=0,
        bytes_accessed=int(data_bytes + H_out * H * 4 + W * W_out * xb))

    out3 = pl.pallas_call(
        functools.partial(_separable_kernel, merge_w_pass=merge_w_pass),
        out_shape=jax.ShapeDtypeStruct((N, H_out, W_out), orig_dtype),
        grid_spec=pltpu.PrefetchScalarGridSpec(
            num_scalar_prefetch=0,
            grid=grid,
            in_specs=[
                pl.BlockSpec((tb, H, W), lambda i: (i, 0, 0)),
                wh_spec,
                ww_spec,
            ],
            out_specs=pl.BlockSpec((tb, H_out, W_out), lambda i: (i, 0, 0)),
        ),
        compiler_params=pltpu.CompilerParams(
            dimension_semantics=("parallel",),
            vmem_limit_bytes=vmem_limit,
        ),
        cost_estimate=cost,
    )(x3, wh, wwT)
    return out3.reshape(B, C, H_out, W_out)


if __name__ == "__main__":
    key = jax.random.PRNGKey(0)
    x = jax.random.normal(key, (2, 4, 16, 16), dtype=jnp.float32)

    # 2x bilinear upsample (typical actgen usage) — fused single-matmul path.
    y = upsample(x, scale_factor=2, mode="bilinear", align_corners=False)
    y = jax.block_until_ready(y)
    assert y.shape == (2, 4, 32, 32), y.shape

    # Pure-JAX reference using the same (cached numpy) interpolation matrices.
    wh_np = _interp_matrix(32, 16, "bilinear", False, 2.0)
    ww_np = _interp_matrix(32, 16, "bilinear", False, 2.0)
    ref = jnp.einsum("oh,bchw,pw->bcop", jnp.asarray(wh_np), x, jnp.asarray(ww_np))
    assert jnp.allclose(y, ref, atol=1e-4, rtol=1e-4), float(jnp.max(jnp.abs(y - ref)))

    # Separable (merged W-pass matmul + batched H-pass) path, forced.
    y_sep = jax.block_until_ready(
        upsample(x, scale_factor=2, mode="bilinear", align_corners=False,
                 force_separable=True))
    assert jnp.allclose(y_sep, ref, atol=1e-4, rtol=1e-4)

    # Nearest mode: for an exact 2x factor this must equal a pure 2x repeat.
    y_nn = jax.block_until_ready(
        upsample(x, scale_factor=2, mode="nearest", align_corners=None))
    ref_nn = jnp.repeat(jnp.repeat(x, 2, axis=2), 2, axis=3)
    assert jnp.allclose(y_nn, ref_nn, atol=1e-6, rtol=1e-6)

    # bf16 input stays bf16 end-to-end (halved DMA bytes, f32 accumulation).
    xb16 = x.astype(jnp.bfloat16)
    y_b16 = jax.block_until_ready(
        upsample(xb16, scale_factor=2, mode="bilinear", align_corners=False))
    assert y_b16.dtype == jnp.bfloat16
    assert jnp.allclose(y_b16.astype(jnp.float32), ref, atol=0.1, rtol=0.1)

    print("KERNEL_OK")
</pallas_src>

<mosaic_0001>
module attributes {stable_mosaic.version = 11 : i64} {
  func.func @_fused_kernel(%arg0: i32, %arg1: memref<8x256xf32, #tpu.memory_space<vmem>>, %arg2: memref<256x1024xf32, #tpu.memory_space<vmem>>, %arg3: memref<8x1024xf32, #tpu.memory_space<vmem>>) attributes {dimension_semantics = [#tpu.dimension_semantics<parallel>], iteration_bounds = array<i64: 1>, scalar_prefetch = 0 : i64, scratch_operands = 0 : i64, tpu.core_type = #tpu.core_type<tc>, window_params = [{transform_indices = @transform_0, window_bounds = array<i64: 8, 256>}, {pipeline_mode = #tpu.pipeline_mode<synchronous>, transform_indices = @transform_1, window_bounds = array<i64: 256, 1024>}, {transform_indices = @transform_2, window_bounds = array<i64: 8, 1024>}]} {
    %c0 = arith.constant 0 : index
    %c0_0 = arith.constant 0 : index
    %0 = vector.load %arg1[%c0, %c0_0] : memref<8x256xf32, #tpu.memory_space<vmem>>, vector<8x256xf32>
    %c0_1 = arith.constant 0 : index
    %c0_2 = arith.constant 0 : index
    %1 = vector.load %arg2[%c0_1, %c0_2] : memref<256x1024xf32, #tpu.memory_space<vmem>>, vector<256x1024xf32>
    %cst = arith.constant dense<0.000000e+00> : vector<8x1024xf32>
    %2 = tpu.matmul %0, %1, %cst {dimension_numbers = #tpu.dot_dimension_numbers<[1], [0], [0], [1], [0, 0, 1, 1], [], []>} : vector<8x256xf32>, vector<256x1024xf32>, vector<8x1024xf32> -> vector<8x1024xf32>
    %c0_3 = arith.constant 0 : index
    %c0_4 = arith.constant 0 : index
    %3 = vector.load %arg3[%c0_3, %c0_4] : memref<8x1024xf32, #tpu.memory_space<vmem>>, vector<8x1024xf32>
    tpu.vector_store %arg3[%c0_3, %c0_4], %2 {strides = array<i32>} : memref<8x1024xf32, #tpu.memory_space<vmem>>, vector<8x1024xf32>,
    return
  }
  func.func @transform_0(%arg0: i32) -> (i32, i32) {
    %c0_i32 = arith.constant 0 : i32
    %c0_i32_0 = arith.constant 0 : i32
    return %arg0, %c0_i32 : i32, i32
  }
  func.func @transform_1(%arg0: i32) -> (i32, i32) {
    %c0_i32 = arith.constant 0 : i32
    %c0_i32_0 = arith.constant 0 : i32
    %c0_i32_1 = arith.constant 0 : i32
    return %c0_i32, %c0_i32_0 : i32, i32
  }
  func.func @transform_2(%arg0: i32) -> (i32, i32) {
    %c0_i32 = arith.constant 0 : i32
    %c0_i32_0 = arith.constant 0 : i32
    return %arg0, %c0_i32 : i32, i32
  }
}

</mosaic_0001>

<llo_original>
// kernel: upsample.1
$region0: #{upsample.1}
  #allocation0 [shape = 'u32[]', space=smem, size = 0x4, offset = 0x4, fixed_abs, tag = 'smem constant byte address 0x4 - core index']
  #allocation1 [shape = 'u32[72,128]{1,0:T(1,128)}', space=vmem, size = 0x9000, scoped, tag = 'internal scratch']
  %s0 = inlined_call_operand.vmem [shape: f32[8,256], index: 0, kind: input, shape index: {}]
  %s1 = inlined_call_operand.hbm [shape: f32[256,1024], index: 1, kind: input, shape index: {}]
  %s2 = inlined_call_operand.vmem [shape: f32[8,1024], index: 2, kind: output, shape index: {}]
  %s3 = sld [smem:[#allocation0]]
  $region22: #{upsample.1} parent=0
    _
  %s5 = ssub.s32 1, %s3
  %s6 = scalar_select 0, %s5, %s3
  $region1: #{upsample.1} parent=0
    #allocation2 [shape = 'u8[1048576]{0}', space=vmem, size = 0x100000, scoped, tag = 'input window, operand 1, single buffered']
    #allocation3 [shape = 's32[1]{0}', space=sflag, size = 0x4, scoped, tag = 'scoped memory for upsample.1']
    %7 = vsyncpa [#allocation3], 0
    // Predicated region
    $region2: #{upsample.1} parent=1 // pred_check
      _
    $region3: #{upsample.1} parent=1 // pred_check_branch
      %9 = sbr.rel (0) target = $region5
    $region4: #{upsample.1} parent=1 // pred_region
      _
    $region5: #{upsample.1} parent=1 // pred_fallthru
      _
    // Predicated region
    $region6: #{upsample.1} parent=1 // pred_check
      _
    $region7: #{upsample.1} parent=1 // pred_check_branch
      %11 = sbr.rel (0) target = $region9
    $region8: #{upsample.1} parent=1 // pred_region
      %13 = vsyncadd [#allocation3], 0
      %s14 = sshll.u32 %s1, 4
      %s15 = int_to_ptr.hbm [resolvable:$true] %s14
      %s16 = sshll.u32 [#allocation2], 4
      %s17 = int_to_ptr.vmem [resolvable:$true] %s16
      %22 = dma.hbm_to_vmem [thread:$0]  %s15, 32768, %s17, [#allocation3], 1024, 1024, 64
    $region9: #{upsample.1} parent=1 // pred_fallthru
      _
    // Predicated region
    $region10: #{upsample.1} parent=1 // pred_check
      _
    $region11: #{upsample.1} parent=1 // pred_check_branch
      %24 = sbr.rel (0) target = $region13
    $region12: #{upsample.1} parent=1 // pred_region
      %26 = dma.done [#allocation3], 32768
    $region13: #{upsample.1} parent=1 // pred_fallthru
      _
    %v27 = vld [vmem:[%s0] sm:$0xff]
    %v28 = vld [vmem:[%s0 + $0x8] sm:$0xff]
    %v29 = vld [vmem:[#allocation2] sm:$0xff]
    %v30 = vld [vmem:[#allocation2 + $0x8] sm:$0xff]
    %v31 = vld [vmem:[#allocation2 + $0x10] sm:$0xff]
    %v32 = vld [vmem:[#allocation2 + $0x18] sm:$0xff]
    %v33 = vld [vmem:[#allocation2 + $0x20] sm:$0xff]
    %v34 = vld [vmem:[#allocation2 + $0x28] sm:$0xff]
    %v35 = vld [vmem:[#allocation2 + $0x30] sm:$0xff]
    %v36 = vld [vmem:[#allocation2 + $0x38] sm:$0xff]
    %v37 = vld [vmem:[#allocation2 + $0x40] sm:$0xff]
    %v38 = vld [vmem:[#allocation2 + $0x48] sm:$0xff]
    %v39 = vld [vmem:[#allocation2 + $0x50] sm:$0xff]
    %v40 = vld [vmem:[#allocation2 + $0x58] sm:$0xff]
    %v41 = vld [vmem:[#allocation2 + $0x60] sm:$0xff]
    %v42 = vld [vmem:[#allocation2 + $0x68] sm:$0xff]
    %v43 = vld [vmem:[#allocation2 + $0x70] sm:$0xff]
    %v44 = vld [vmem:[#allocation2 + $0x78] sm:$0xff]
    %v45 = vld [vmem:[#allocation2 + $0x80] sm:$0xff]
    %v46 = vld [vmem:[#allocation2 + $0x88] sm:$0xff]
    %v47 = vld [vmem:[#allocation2 + $0x90] sm:$0xff]
    %v48 = vld [vmem:[#allocation2 + $0x98] sm:$0xff]
    %v49 = vld [vmem:[#allocation2 + $0xa0] sm:$0xff]
    %v50 = vld [vmem:[#allocation2 + $0xa8] sm:$0xff]
    %v51 = vld [vmem:[#allocation2 + $0xb0] sm:$0xff]
    %v52 = vld [vmem:[#allocation2 + $0xb8] sm:$0xff]
    %v53 = vld [vmem:[#allocation2 + $0xc0] sm:$0xff]
    %v54 = vld [vmem:[#allocation2 + $0xc8] sm:$0xff]
    %v55 = vld [vmem:[#allocation2 + $0xd0] sm:$0xff]
    %v56 = vld [vmem:[#allocation2 + $0xd8] sm:$0xff]
    %v57 = vld [vmem:[#allocation2 + $0xe0] sm:$0xff]
    %v58 = vld [vmem:[#allocation2 + $0xe8] sm:$0xff]
    %v59 = vld [vmem:[#allocation2 + $0xf0] sm:$0xff]
    %v60 = vld [vmem:[#allocation2 + $0xf8] sm:$0xff]
    %v61 = vld [vmem:[#allocation2 + $0x100] sm:$0xff]
    %v62 = vld [vmem:[#allocation2 + $0x108] sm:$0xff]
    %v63 = vld [vmem:[#allocation2 + $0x110] sm:$0xff]
    %v64 = vld [vmem:[#allocation2 + $0x118] sm:$0xff]
    %v65 = vld [vmem:[#allocation2 + $0x120] sm:$0xff]
    %v66 = vld [vmem:[#allocation2 + $0x128] sm:$0xff]
    %v67 = vld [vmem:[#allocation2 + $0x130] sm:$0xff]
    %v68 = vld [vmem:[#allocation2 + $0x138] sm:$0xff]
    %v69 = vld [vmem:[#allocation2 + $0x140] sm:$0xff]
    %v70 = vld [vmem:[#allocation2 + $0x148] sm:$0xff]
    %v71 = vld [vmem:[#allocation2 + $0x150] sm:$0xff]
    %v72 = vld [vmem:[#allocation2 + $0x158] sm:$0xff]
    %v73 = vld [vmem:[#allocation2 + $0x160] sm:$0xff]
    %v74 = vld [vmem:[#allocation2 + $0x168] sm:$0xff]
    %v75 = vld [vmem:[#allocation2 + $0x170] sm:$0xff]
    %v76 = vld [vmem:[#allocation2 + $0x178] sm:$0xff]
    %v77 = vld [vmem:[#allocation2 + $0x180] sm:$0xff]
    %v78 = vld [vmem:[#allocation2 + $0x188] sm:$0xff]
    %v79 = vld [vmem:[#allocation2 + $0x190] sm:$0xff]
    %v80 = vld [vmem:[#allocation2 + $0x198] sm:$0xff]
    %v81 = vld [vmem:[#allocation2 + $0x1a0] sm:$0xff]
    %v82 = vld [vmem:[#allocation2 + $0x1a8] sm:$0xff]
    %v83 = vld [vmem:[#allocation2 + $0x1b0] sm:$0xff]
    %v84 = vld [vmem:[#allocation2 + $0x1b8] sm:$0xff]
    %v85 = vld [vmem:[#allocation2 + $0x1c0] sm:$0xff]
    %v86 = vld [vmem:[#allocation2 + $0x1c8] sm:$0xff]
    %v87 = vld [vmem:[#allocation2 + $0x1d0] sm:$0xff]
    %v88 = vld [vmem:[#allocation2 + $0x1d8] sm:$0xff]
    %v89 = vld [vmem:[#allocation2 + $0x1e0] sm:$0xff]
    %v90 = vld [vmem:[#allocation2 + $0x1e8] sm:$0xff]
    %v91 = vld [vmem:[#allocation2 + $0x1f0] sm:$0xff]
    %v92 = vld [vmem:[#allocation2 + $0x1f8] sm:$0xff]
    %v93 = vld [vmem:[#allocation2 + $0x200] sm:$0xff]
    %v94 = vld [vmem:[#allocation2 + $0x208] sm:$0xff]
    %v95 = vld [vmem:[#allocation2 + $0x210] sm:$0xff]
    %v96 = vld [vmem:[#allocation2 + $0x218] sm:$0xff]
    %v97 = vld [vmem:[#allocation2 + $0x220] sm:$0xff]
    %v98 = vld [vmem:[#allocation2 + $0x228] sm:$0xff]
    %v99 = vld [vmem:[#allocation2 + $0x230] sm:$0xff]
    %v100 = vld [vmem:[#allocation2 + $0x238] sm:$0xff]
    %v101 = vld [vmem:[#allocation2 + $0x240] sm:$0xff]
    %v102 = vld [vmem:[#allocation2 + $0x248] sm:$0xff]
    %v103 = vld [vmem:[#allocation2 + $0x250] sm:$0xff]
    %v104 = vld [vmem:[#allocation2 + $0x258] sm:$0xff]
    %v105 = vld [vmem:[#allocation2 + $0x260] sm:$0xff]
    %v106 = vld [vmem:[#allocation2 + $0x268] sm:$0xff]
    %v107 = vld [vmem:[#allocation2 + $0x270] sm:$0xff]
    %v108 = vld [vmem:[#allocation2 + $0x278] sm:$0xff]
    %v109 = vld [vmem:[#allocation2 + $0x280] sm:$0xff]
    %v110 = vld [vmem:[#allocation2 + $0x288] sm:$0xff]
    %v111 = vld [vmem:[#allocation2 + $0x290] sm:$0xff]
    %v112 = vld [vmem:[#allocation2 + $0x298] sm:$0xff]
    %v113 = vld [vmem:[#allocation2 + $0x2a0] sm:$0xff]
    %v114 = vld [vmem:[#allocation2 + $0x2a8] sm:$0xff]
    %v115 = vld [vmem:[#allocation2 + $0x2b0] sm:$0xff]
    %v116 = vld [vmem:[#allocation2 + $0x2b8] sm:$0xff]
    %v117 = vld [vmem:[#allocation2 + $0x2c0] sm:$0xff]
    %v118 = vld [vmem:[#allocation2 + $0x2c8] sm:$0xff]
    %v119 = vld [vmem:[#allocation2 + $0x2d0] sm:$0xff]
    %v120 = vld [vmem:[#allocation2 + $0x2d8] sm:$0xff]
    %v121 = vld [vmem:[#allocation2 + $0x2e0] sm:$0xff]
    %v122 = vld [vmem:[#allocation2 + $0x2e8] sm:$0xff]
    %v123 = vld [vmem:[#allocation2 + $0x2f0] sm:$0xff]
    %v124 = vld [vmem:[#allocation2 + $0x2f8] sm:$0xff]
    %v125 = vld [vmem:[#allocation2 + $0x300] sm:$0xff]
    %v126 = vld [vmem:[#allocation2 + $0x308] sm:$0xff]
    %v127 = vld [vmem:[#allocation2 + $0x310] sm:$0xff]
    %v128 = vld [vmem:[#allocation2 + $0x318] sm:$0xff]
    %v129 = vld [vmem:[#allocation2 + $0x320] sm:$0xff]
    %v130 = vld [vmem:[#allocation2 + $0x328] sm:$0xff]
    %v131 = vld [vmem:[#allocation2 + $0x330] sm:$0xff]
    %v132 = vld [vmem:[#allocation2 + $0x338] sm:$0xff]
    %v133 = vld [vmem:[#allocation2 + $0x340] sm:$0xff]
    %v134 = vld [vmem:[#allocation2 + $0x348] sm:$0xff]
    %v135 = vld [vmem:[#allocation2 + $0x350] sm:$0xff]
    %v136 = vld [vmem:[#allocation2 + $0x358] sm:$0xff]
    %v137 = vld [vmem:[#allocation2 + $0x360] sm:$0xff]
    %v138 = vld [vmem:[#allocation2 + $0x368] sm:$0xff]
    %v139 = vld [vmem:[#allocation2 + $0x370] sm:$0xff]
    %v140 = vld [vmem:[#allocation2 + $0x378] sm:$0xff]
    %v141 = vld [vmem:[#allocation2 + $0x380] sm:$0xff]
    %v142 = vld [vmem:[#allocation2 + $0x388] sm:$0xff]
    %v143 = vld [vmem:[#allocation2 + $0x390] sm:$0xff]
    %v144 = vld [vmem:[#allocation2 + $0x398] sm:$0xff]
    %v145 = vld [vmem:[#allocation2 + $0x3a0] sm:$0xff]
    %v146 = vld [vmem:[#allocation2 + $0x3a8] sm:$0xff]
    %v147 = vld [vmem:[#allocation2 + $0x3b0] sm:$0xff]
    %v148 = vld [vmem:[#allocation2 + $0x3b8] sm:$0xff]
    %v149 = vld [vmem:[#allocation2 + $0x3c0] sm:$0xff]
    %v150 = vld [vmem:[#allocation2 + $0x3c8] sm:$0xff]
    %v151 = vld [vmem:[#allocation2 + $0x3d0] sm:$0xff]
    %v152 = vld [vmem:[#allocation2 + $0x3d8] sm:$0xff]
    %v153 = vld [vmem:[#allocation2 + $0x3e0] sm:$0xff]
    %v154 = vld [vmem:[#allocation2 + $0x3e8] sm:$0xff]
    %v155 = vld [vmem:[#allocation2 + $0x3f0] sm:$0xff]
    %v156 = vld [vmem:[#allocation2 + $0x3f8] sm:$0xff]
    %v157 = vld [vmem:[#allocation2 + $0x400] sm:$0xff]
    %v158 = vld [vmem:[#allocation2 + $0x408] sm:$0xff]
    %v159 = vld [vmem:[#allocation2 + $0x410] sm:$0xff]
    %v160 = vld [vmem:[#allocation2 + $0x418] sm:$0xff]
    %v161 = vld [vmem:[#allocation2 + $0x420] sm:$0xff]
    %v162 = vld [vmem:[#allocation2 + $0x428] sm:$0xff]
    %v163 = vld [vmem:[#allocation2 + $0x430] sm:$0xff]
    %v164 = vld [vmem:[#allocation2 + $0x438] sm:$0xff]
    %v165 = vld [vmem:[#allocation2 + $0x440] sm:$0xff]
    %v166 = vld [vmem:[#allocation2 + $0x448] sm:$0xff]
    %v167 = vld [vmem:[#allocation2 + $0x450] sm:$0xff]
    %v168 = vld [vmem:[#allocation2 + $0x458] sm:$0xff]
    %v169 = vld [vmem:[#allocation2 + $0x460] sm:$0xff]
    %v170 = vld [vmem:[#allocation2 + $0x468] sm:$0xff]
    %v171 = vld [vmem:[#allocation2 + $0x470] sm:$0xff]
    %v172 = vld [vmem:[#allocation2 + $0x478] sm:$0xff]
    %v173 = vld [vmem:[#allocation2 + $0x480] sm:$0xff]
    %v174 = vld [vmem:[#allocation2 + $0x488] sm:$0xff]
    %v175 = vld [vmem:[#allocation2 + $0x490] sm:$0xff]
    %v176 = vld [vmem:[#allocation2 + $0x498] sm:$0xff]
    %v177 = vld [vmem:[#allocation2 + $0x4a0] sm:$0xff]
    %v178 = vld [vmem:[#allocation2 + $0x4a8] sm:$0xff]
    %v179 = vld [vmem:[#allocation2 + $0x4b0] sm:$0xff]
    %v180 = vld [vmem:[#allocation2 + $0x4b8] sm:$0xff]
    %v181 = vld [vmem:[#allocation2 + $0x4c0] sm:$0xff]
    %v182 = vld [vmem:[#allocation2 + $0x4c8] sm:$0xff]
    %v183 = vld [vmem:[#allocation2 + $0x4d0] sm:$0xff]
    %v184 = vld [vmem:[#allocation2 + $0x4d8] sm:$0xff]
    %v185 = vld [vmem:[#allocation2 + $0x4e0] sm:$0xff]
    %v186 = vld [vmem:[#allocation2 + $0x4e8] sm:$0xff]
    %v187 = vld [vmem:[#allocation2 + $0x4f0] sm:$0xff]
    %v188 = vld [vmem:[#allocation2 + $0x4f8] sm:$0xff]
    %v189 = vld [vmem:[#allocation2 + $0x500] sm:$0xff]
    %v190 = vld [vmem:[#allocation2 + $0x508] sm:$0xff]
    %v191 = vld [vmem:[#allocation2 + $0x510] sm:$0xff]
    %v192 = vld [vmem:[#allocation2 + $0x518] sm:$0xff]
    %v193 = vld [vmem:[#allocation2 + $0x520] sm:$0xff]
    %v194 = vld [vmem:[#allocation2 + $0x528] sm:$0xff]
    %v195 = vld [vmem:[#allocation2 + $0x530] sm:$0xff]
    %v196 = vld [vmem:[#allocation2 + $0x538] sm:$0xff]
    %v197 = vld [vmem:[#allocation2 + $0x540] sm:$0xff]
    %v198 = vld [vmem:[#allocation2 + $0x548] sm:$0xff]
    %v199 = vld [vmem:[#allocation2 + $0x550] sm:$0xff]
    %v200 = vld [vmem:[#allocation2 + $0x558] sm:$0xff]
    %v201 = vld [vmem:[#allocation2 + $0x560] sm:$0xff]
    %v202 = vld [vmem:[#allocation2 + $0x568] sm:$0xff]
    %v203 = vld [vmem:[#allocation2 + $0x570] sm:$0xff]
    %v204 = vld [vmem:[#allocation2 + $0x578] sm:$0xff]
    %v205 = vld [vmem:[#allocation2 + $0x580] sm:$0xff]
    %v206 = vld [vmem:[#allocation2 + $0x588] sm:$0xff]
    %v207 = vld [vmem:[#allocation2 + $0x590] sm:$0xff]
    %v208 = vld [vmem:[#allocation2 + $0x598] sm:$0xff]
    %v209 = vld [vmem:[#allocation2 + $0x5a0] sm:$0xff]
    %v210 = vld [vmem:[#allocation2 + $0x5a8] sm:$0xff]
    %v211 = vld [vmem:[#allocation2 + $0x5b0] sm:$0xff]
    %v212 = vld [vmem:[#allocation2 + $0x5b8] sm:$0xff]
    %v213 = vld [vmem:[#allocation2 + $0x5c0] sm:$0xff]
    %v214 = vld [vmem:[#allocation2 + $0x5c8] sm:$0xff]
    %v215 = vld [vmem:[#allocation2 + $0x5d0] sm:$0xff]
    %v216 = vld [vmem:[#allocation2 + $0x5d8] sm:$0xff]
    %v217 = vld [vmem:[#allocation2 + $0x5e0] sm:$0xff]
    %v218 = vld [vmem:[#allocation2 + $0x5e8] sm:$0xff]
    %v219 = vld [vmem:[#allocation2 + $0x5f0] sm:$0xff]
    %v220 = vld [vmem:[#allocation2 + $0x5f8] sm:$0xff]
    %v221 = vld [vmem:[#allocation2 + $0x600] sm:$0xff]
    %v222 = vld [vmem:[#allocation2 + $0x608] sm:$0xff]
    %v223 = vld [vmem:[#allocation2 + $0x610] sm:$0xff]
    %v224 = vld [vmem:[#allocation2 + $0x618] sm:$0xff]
    %v225 = vld [vmem:[#allocation2 + $0x620] sm:$0xff]
    %v226 = vld [vmem:[#allocation2 + $0x628] sm:$0xff]
    %v227 = vld [vmem:[#allocation2 + $0x630] sm:$0xff]
    %v228 = vld [vmem:[#allocation2 + $0x638] sm:$0xff]
    %v229 = vld [vmem:[#allocation2 + $0x640] sm:$0xff]
    %v230 = vld [vmem:[#allocation2 + $0x648] sm:$0xff]
    %v231 = vld [vmem:[#allocation2 + $0x650] sm:$0xff]
    %v232 = vld [vmem:[#allocation2 + $0x658] sm:$0xff]
    %v233 = vld [vmem:[#allocation2 + $0x660] sm:$0xff]
    %v234 = vld [vmem:[#allocation2 + $0x668] sm:$0xff]
    %v235 = vld [vmem:[#allocation2 + $0x670] sm:$0xff]
    %v236 = vld [vmem:[#allocation2 + $0x678] sm:$0xff]
    %v237 = vld [vmem:[#allocation2 + $0x680] sm:$0xff]
    %v238 = vld [vmem:[#allocation2 + $0x688] sm:$0xff]
    %v239 = vld [vmem:[#allocation2 + $0x690] sm:$0xff]
    %v240 = vld [vmem:[#allocation2 + $0x698] sm:$0xff]
    %v241 = vld [vmem:[#allocation2 + $0x6a0] sm:$0xff]
    %v242 = vld [vmem:[#allocation2 + $0x6a8] sm:$0xff]
    %v243 = vld [vmem:[#allocation2 + $0x6b0] sm:$0xff]
    %v244 = vld [vmem:[#allocation2 + $0x6b8] sm:$0xff]
    %v245 = vld [vmem:[#allocation2 + $0x6c0] sm:$0xff]
    %v246 = vld [vmem:[#allocation2 + $0x6c8] sm:$0xff]
    %v247 = vld [vmem:[#allocation2 + $0x6d0] sm:$0xff]
    %v248 = vld [vmem:[#allocation2 + $0x6d8] sm:$0xff]
    %v249 = vld [vmem:[#allocation2 + $0x6e0] sm:$0xff]
    %v250 = vld [vmem:[#allocation2 + $0x6e8] sm:$0xff]
    %v251 = vld [vmem:[#allocation2 + $0x6f0] sm:$0xff]
    %v252 = vld [vmem:[#allocation2 + $0x6f8] sm:$0xff]
    %v253 = vld [vmem:[#allocation2 + $0x700] sm:$0xff]
    %v254 = vld [vmem:[#allocation2 + $0x708] sm:$0xff]
    %v255 = vld [vmem:[#allocation2 + $0x710] sm:$0xff]
    %v256 = vld [vmem:[#allocation2 + $0x718] sm:$0xff]
    %v257 = vld [vmem:[#allocation2 + $0x720] sm:$0xff]
    %v258 = vld [vmem:[#allocation2 + $0x728] sm:$0xff]
    %v259 = vld [vmem:[#allocation2 + $0x730] sm:$0xff]
    %v260 = vld [vmem:[#allocation2 + $0x738] sm:$0xff]
    %v261 = vld [vmem:[#allocation2 + $0x740] sm:$0xff]
    %v262 = vld [vmem:[#allocation2 + $0x748] sm:$0xff]
    %v263 = vld [vmem:[#allocation2 + $0x750] sm:$0xff]
    %v264 = vld [vmem:[#allocation2 + $0x758] sm:$0xff]
    %v265 = vld [vmem:[#allocation2 + $0x760] sm:$0xff]
    %v266 = vld [vmem:[#allocation2 + $0x768] sm:$0xff]
    %v267 = vld [vmem:[#allocation2 + $0x770] sm:$0xff]
    %v268 = vld [vmem:[#allocation2 + $0x778] sm:$0xff]
    %v269 = vld [vmem:[#allocation2 + $0x780] sm:$0xff]
    %v270 = vld [vmem:[#allocation2 + $0x788] sm:$0xff]
    %v271 = vld [vmem:[#allocation2 + $0x790] sm:$0xff]
    %v272 = vld [vmem:[#allocation2 + $0x798] sm:$0xff]
    %v273 = vld [vmem:[#allocation2 + $0x7a0] sm:$0xff]
    %v274 = vld [vmem:[#allocation2 + $0x7a8] sm:$0xff]
    %v275 = vld [vmem:[#allocation2 + $0x7b0] sm:$0xff]
    %v276 = vld [vmem:[#allocation2 + $0x7b8] sm:$0xff]
    %v277 = vld [vmem:[#allocation2 + $0x7c0] sm:$0xff]
    %v278 = vld [vmem:[#allocation2 + $0x7c8] sm:$0xff]
    %v279 = vld [vmem:[#allocation2 + $0x7d0] sm:$0xff]
    %v280 = vld [vmem:[#allocation2 + $0x7d8] sm:$0xff]
    %v281 = vld [vmem:[#allocation2 + $0x7e0] sm:$0xff]
    %v282 = vld [vmem:[#allocation2 + $0x7e8] sm:$0xff]
    %v283 = vld [vmem:[#allocation2 + $0x7f0] sm:$0xff]
    %v284 = vld [vmem:[#allocation2 + $0x7f8] sm:$0xff]
    %285 = vmatpush.msra.mxu0 %v149
    %286 = vmatpush.msra.mxu0 %v141
    %287 = vmatpush.msra.mxu0 %v133
    %288 = vmatpush.msra.mxu0 %v125
    %289 = vmatpush.msra.mxu0 %v117
    %290 = vmatpush.msra.mxu0 %v109
    %291 = vmatpush.msra.mxu0 %v101
    %292 = vmatpush.msra.mxu0 %v93
    %293 = vmatpush.msra.mxu0 %v85
    %294 = vmatpush.msra.mxu0 %v77
    %295 = vmatpush.msra.mxu0 %v69
    %296 = vmatpush.msra.mxu0 %v61
    %297 = vmatpush.msra.mxu0 %v53
    %298 = vmatpush.msra.mxu0 %v45
    %299 = vmatpush.msra.mxu0 %v37
    %300 = vmatpush.msra.mxu0 %v29
    %301 = vmatmul.f32.gmra.mxu0 %v27
    %v302 = vpop.f32.mrf.mxu0
    %v303 = vadd.f32 0.0, %v302
    %304 = vdwg.mxu0
    %305 = vmatpush.msra.mxu0 %v277
    %306 = vmatpush.msra.mxu0 %v269
    %307 = vmatpush.msra.mxu0 %v261
    %308 = vmatpush.msra.mxu0 %v253
    %309 = vmatpush.msra.mxu0 %v245
    %310 = vmatpush.msra.mxu0 %v237
    %311 = vmatpush.msra.mxu0 %v229
    %312 = vmatpush.msra.mxu0 %v221
    %313 = vmatpush.msra.mxu0 %v213
    %314 = vmatpush.msra.mxu0 %v205
    %315 = vmatpush.msra.mxu0 %v197
    %316 = vmatpush.msra.mxu0 %v189
    %317 = vmatpush.msra.mxu0 %v181
    %318 = vmatpush.msra.mxu0 %v173
    %319 = vmatpush.msra.mxu0 %v165
    %320 = vmatpush.msra.mxu0 %v157
    %321 = vmatmul.f32.gmra.mxu0 %v28
    %v322 = vpop.f32.mrf.mxu0
    %v323 = vadd.f32 %v303, %v322
    %324 = vdwg.mxu0
    %325 = vmatpush.msra.mxu0 %v150
    %326 = vmatpush.msra.mxu0 %v142
    %327 = vmatpush.msra.mxu0 %v134
    %328 = vmatpush.msra.mxu0 %v126
    %329 = vmatpush.msra.mxu0 %v118
    %330 = vmatpush.msra.mxu0 %v110
    %331 = vmatpush.msra.mxu0 %v102
    %332 = vmatpush.msra.mxu0 %v94
    %333 = vmatpush.msra.mxu0 %v86
    %334 = vmatpush.msra.mxu0 %v78
    %335 = vmatpush.msra.mxu0 %v70
    %336 = vmatpush.msra.mxu0 %v62
    %337 = vmatpush.msra.mxu0 %v54
    %338 = vmatpush.msra.mxu0 %v46
    %339 = vmatpush.msra.mxu0 %v38
    %340 = vmatpush.msra.mxu0 %v30
    %341 = vmatmul.f32.gmra.mxu0 %v27
    %v342 = vpop.f32.mrf.mxu0
    %v343 = vadd.f32 0.0, %v342
    %344 = vdwg.mxu0
    %345 = vmatpush.msra.mxu0 %v278
    %346 = vmatpush.msra.mxu0 %v270
    %347 = vmatpush.msra.mxu0 %v262
    %348 = vmatpush.msra.mxu0 %v254
    %349 = vmatpush.msra.mxu0 %v246
    %350 = vmatpush.msra.mxu0 %v238
    %351 = vmatpush.msra.mxu0 %v230
    %352 = vmatpush.msra.mxu0 %v222
    %353 = vmatpush.msra.mxu0 %v214
    %354 = vmatpush.msra.mxu0 %v206
    %355 = vmatpush.msra.mxu0 %v198
    %356 = vmatpush.msra.mxu0 %v190
    %357 = vmatpush.msra.mxu0 %v182
    %358 = vmatpush.msra.mxu0 %v174
    %359 = vmatpush.msra.mxu0 %v166
    %360 = vmatpush.msra.mxu0 %v158
    %361 = vmatmul.f32.gmra.mxu0 %v28
    %v362 = vpop.f32.mrf.mxu0
    %v363 = vadd.f32 %v343, %v362
    %364 = vdwg.mxu0
    %365 = vmatpush.msra.mxu0 %v151
    %366 = vmatpush.msra.mxu0 %v143
    %367 = vmatpush.msra.mxu0 %v135
    %368 = vmatpush.msra.mxu0 %v127
    %369 = vmatpush.msra.mxu0 %v119
    %370 = vmatpush.msra.mxu0 %v111
    %371 = vmatpush.msra.mxu0 %v103
    %372 = vmatpush.msra.mxu0 %v95
    %373 = vmatpush.msra.mxu0 %v87
    %374 = vmatpush.msra.mxu0 %v79
    %375 = vmatpush.msra.mxu0 %v71
    %376 = vmatpush.msra.mxu0 %v63
    %377 = vmatpush.msra.mxu0 %v55
    %378 = vmatpush.msra.mxu0 %v47
    %379 = vmatpush.msra.mxu0 %v39
    %380 = vmatpush.msra.mxu0 %v31
    %381 = vmatmul.f32.gmra.mxu0 %v27
    %v382 = vpop.f32.mrf.mxu0
    %v383 = vadd.f32 0.0, %v382
    %384 = vdwg.mxu0
    %385 = vmatpush.msra.mxu0 %v279
    %386 = vmatpush.msra.mxu0 %v271
    %387 = vmatpush.msra.mxu0 %v263
    %388 = vmatpush.msra.mxu0 %v255
    %389 = vmatpush.msra.mxu0 %v247
    %390 = vmatpush.msra.mxu0 %v239
    %391 = vmatpush.msra.mxu0 %v231
    %392 = vmatpush.msra.mxu0 %v223
    %393 = vmatpush.msra.mxu0 %v215
    %394 = vmatpush.msra.mxu0 %v207
    %395 = vmatpush.msra.mxu0 %v199
    %396 = vmatpush.msra.mxu0 %v191
    %397 = vmatpush.msra.mxu0 %v183
    %398 = vmatpush.msra.mxu0 %v175
    %399 = vmatpush.msra.mxu0 %v167
    %400 = vmatpush.msra.mxu0 %v159
    %401 = vmatmul.f32.gmra.mxu0 %v28
    %v402 = vpop.f32.mrf.mxu0
    %v403 = vadd.f32 %v383, %v402
    %404 = vdwg.mxu0
    %405 = vmatpush.msra.mxu0 %v152
    %406 = vmatpush.msra.mxu0 %v144
    %407 = vmatpush.msra.mxu0 %v136
    %408 = vmatpush.msra.mxu0 %v128
    %409 = vmatpush.msra.mxu0 %v120
    %410 = vmatpush.msra.mxu0 %v112
    %411 = vmatpush.msra.mxu0 %v104
    %412 = vmatpush.msra.mxu0 %v96
    %413 = vmatpush.msra.mxu0 %v88
    %414 = vmatpush.msra.mxu0 %v80
    %415 = vmatpush.msra.mxu0 %v72
    %416 = vmatpush.msra.mxu0 %v64
    %417 = vmatpush.msra.mxu0 %v56
    %418 = vmatpush.msra.mxu0 %v48
    %419 = vmatpush.msra.mxu0 %v40
    %420 = vmatpush.msra.mxu0 %v32
    %421 = vmatmul.f32.gmra.mxu0 %v27
    %v422 = vpop.f32.mrf.mxu0
    %v423 = vadd.f32 0.0, %v422
    %424 = vdwg.mxu0
    %425 = vmatpush.msra.mxu0 %v280
    %426 = vmatpush.msra.mxu0 %v272
    %427 = vmatpush.msra.mxu0 %v264
    %428 = vmatpush.msra.mxu0 %v256
    %429 = vmatpush.msra.mxu0 %v248
    %430 = vmatpush.msra.mxu0 %v240
    %431 = vmatpush.msra.mxu0 %v232
    %432 = vmatpush.msra.mxu0 %v224
    %433 = vmatpush.msra.mxu0 %v216
    %434 = vmatpush.msra.mxu0 %v208
    %435 = vmatpush.msra.mxu0 %v200
    %436 = vmatpush.msra.mxu0 %v192
    %437 = vmatpush.msra.mxu0 %v184
    %438 = vmatpush.msra.mxu0 %v176
    %439 = vmatpush.msra.mxu0 %v168
    %440 = vmatpush.msra.mxu0 %v160
    %441 = vmatmul.f32.gmra.mxu0 %v28
    %v442 = vpop.f32.mrf.mxu0
    %v443 = vadd.f32 %v423, %v442
    %444 = vdwg.mxu0
    %445 = vmatpush.msra.mxu0 %v153
    %446 = vmatpush.msra.mxu0 %v145
    %447 = vmatpush.msra.mxu0 %v137
    %448 = vmatpush.msra.mxu0 %v129
    %449 = vmatpush.msra.mxu0 %v121
    %450 = vmatpush.msra.mxu0 %v113
    %451 = vmatpush.msra.mxu0 %v105
    %452 = vmatpush.msra.mxu0 %v97
    %453 = vmatpush.msra.mxu0 %v89
    %454 = vmatpush.msra.mxu0 %v81
    %455 = vmatpush.msra.mxu0 %v73
    %456 = vmatpush.msra.mxu0 %v65
    %457 = vmatpush.msra.mxu0 %v57
    %458 = vmatpush.msra.mxu0 %v49
    %459 = vmatpush.msra.mxu0 %v41
    %460 = vmatpush.msra.mxu0 %v33
    %461 = vmatmul.f32.gmra.mxu0 %v27
    %v462 = vpop.f32.mrf.mxu0
    %v463 = vadd.f32 0.0, %v462
    %464 = vdwg.mxu0
    %465 = vmatpush.msra.mxu0 %v281
    %466 = vmatpush.msra.mxu0 %v273
    %467 = vmatpush.msra.mxu0 %v265
    %468 = vmatpush.msra.mxu0 %v257
    %469 = vmatpush.msra.mxu0 %v249
    %470 = vmatpush.msra.mxu0 %v241
    %471 = vmatpush.msra.mxu0 %v233
    %472 = vmatpush.msra.mxu0 %v225
    %473 = vmatpush.msra.mxu0 %v217
    %474 = vmatpush.msra.mxu0 %v209
    %475 = vmatpush.msra.mxu0 %v201
    %476 = vmatpush.msra.mxu0 %v193
    %477 = vmatpush.msra.mxu0 %v185
    %478 = vmatpush.msra.mxu0 %v177
    %479 = vmatpush.msra.mxu0 %v169
    %480 = vmatpush.msra.mxu0 %v161
    %481 = vmatmul.f32.gmra.mxu0 %v28
    %v482 = vpop.f32.mrf.mxu0
    %v483 = vadd.f32 %v463, %v482
    %484 = vdwg.mxu0
    %485 = vmatpush.msra.mxu0 %v154
    %486 = vmatpush.msra.mxu0 %v146
    %487 = vmatpush.msra.mxu0 %v138
    %488 = vmatpush.msra.mxu0 %v130
    %489 = vmatpush.msra.mxu0 %v122
    %490 = vmatpush.msra.mxu0 %v114
    %491 = vmatpush.msra.mxu0 %v106
    %492 = vmatpush.msra.mxu0 %v98
    %493 = vmatpush.msra.mxu0 %v90
    %494 = vmatpush.msra.mxu0 %v82
    %495 = vmatpush.msra.mxu0 %v74
    %496 = vmatpush.msra.mxu0 %v66
    %497 = vmatpush.msra.mxu0 %v58
    %498 = vmatpush.msra.mxu0 %v50
    %499 = vmatpush.msra.mxu0 %v42
    %500 = vmatpush.msra.mxu0 %v34
    %501 = vmatmul.f32.gmra.mxu0 %v27
    %v502 = vpop.f32.mrf.mxu0
    %v503 = vadd.f32 0.0, %v502
    %504 = vdwg.mxu0
    %505 = vmatpush.msra.mxu0 %v282
    %506 = vmatpush.msra.mxu0 %v274
    %507 = vmatpush.msra.mxu0 %v266
    %508 = vmatpush.msra.mxu0 %v258
    %509 = vmatpush.msra.mxu0 %v250
    %510 = vmatpush.msra.mxu0 %v242
    %511 = vmatpush.msra.mxu0 %v234
    %512 = vmatpush.msra.mxu0 %v226
    %513 = vmatpush.msra.mxu0 %v218
    %514 = vmatpush.msra.mxu0 %v210
    %515 = vmatpush.msra.mxu0 %v202
    %516 = vmatpush.msra.mxu0 %v194
    %517 = vmatpush.msra.mxu0 %v186
    %518 = vmatpush.msra.mxu0 %v178
    %519 = vmatpush.msra.mxu0 %v170
    %520 = vmatpush.msra.mxu0 %v162
    %521 = vmatmul.f32.gmra.mxu0 %v28
    %v522 = vpop.f32.mrf.mxu0
    %v523 = vadd.f32 %v503, %v522
    %524 = vdwg.mxu0
    %525 = vmatpush.msra.mxu0 %v155
    %526 = vmatpush.msra.mxu0 %v147
    %527 = vmatpush.msra.mxu0 %v139
    %528 = vmatpush.msra.mxu0 %v131
    %529 = vmatpush.msra.mxu0 %v123
    %530 = vmatpush.msra.mxu0 %v115
    %531 = vmatpush.msra.mxu0 %v107
    %532 = vmatpush.msra.mxu0 %v99
    %533 = vmatpush.msra.mxu0 %v91
    %534 = vmatpush.msra.mxu0 %v83
    %535 = vmatpush.msra.mxu0 %v75
    %536 = vmatpush.msra.mxu0 %v67
    %537 = vmatpush.msra.mxu0 %v59
    %538 = vmatpush.msra.mxu0 %v51
    %539 = vmatpush.msra.mxu0 %v43
    %540 = vmatpush.msra.mxu0 %v35
    %541 = vmatmul.f32.gmra.mxu0 %v27
    %v542 = vpop.f32.mrf.mxu0
    %v543 = vadd.f32 0.0, %v542
    %544 = vdwg.mxu0
    %545 = vmatpush.msra.mxu0 %v283
    %546 = vmatpush.msra.mxu0 %v275
    %547 = vmatpush.msra.mxu0 %v267
    %548 = vmatpush.msra.mxu0 %v259
    %549 = vmatpush.msra.mxu0 %v251
    %550 = vmatpush.msra.mxu0 %v243
    %551 = vmatpush.msra.mxu0 %v235
    %552 = vmatpush.msra.mxu0 %v227
    %553 = vmatpush.msra.mxu0 %v219
    %554 = vmatpush.msra.mxu0 %v211
    %555 = vmatpush.msra.mxu0 %v203
    %556 = vmatpush.msra.mxu0 %v195
    %557 = vmatpush.msra.mxu0 %v187
    %558 = vmatpush.msra.mxu0 %v179
    %559 = vmatpush.msra.mxu0 %v171
    %560 = vmatpush.msra.mxu0 %v163
    %561 = vmatmul.f32.gmra.mxu0 %v28
    %v562 = vpop.f32.mrf.mxu0
    %v563 = vadd.f32 %v543, %v562
    %564 = vdwg.mxu0
    %565 = vmatpush.msra.mxu0 %v156
    %566 = vmatpush.msra.mxu0 %v148
    %567 = vmatpush.msra.mxu0 %v140
    %568 = vmatpush.msra.mxu0 %v132
    %569 = vmatpush.msra.mxu0 %v124
    %570 = vmatpush.msra.mxu0 %v116
    %571 = vmatpush.msra.mxu0 %v108
    %572 = vmatpush.msra.mxu0 %v100
    %573 = vmatpush.msra.mxu0 %v92
    %574 = vmatpush.msra.mxu0 %v84
    %575 = vmatpush.msra.mxu0 %v76
    %576 = vmatpush.msra.mxu0 %v68
    %577 = vmatpush.msra.mxu0 %v60
    %578 = vmatpush.msra.mxu0 %v52
    %579 = vmatpush.msra.mxu0 %v44
    %580 = vmatpush.msra.mxu0 %v36
    %581 = vmatmul.f32.gmra.mxu0 %v27
    %v582 = vpop.f32.mrf.mxu0
    %v583 = vadd.f32 0.0, %v582
    %584 = vdwg.mxu0
    %585 = vmatpush.msra.mxu0 %v284
    %586 = vmatpush.msra.mxu0 %v276
    %587 = vmatpush.msra.mxu0 %v268
    %588 = vmatpush.msra.mxu0 %v260
    %589 = vmatpush.msra.mxu0 %v252
    %590 = vmatpush.msra.mxu0 %v244
    %591 = vmatpush.msra.mxu0 %v236
    %592 = vmatpush.msra.mxu0 %v228
    %593 = vmatpush.msra.mxu0 %v220
    %594 = vmatpush.msra.mxu0 %v212
    %595 = vmatpush.msra.mxu0 %v204
    %596 = vmatpush.msra.mxu0 %v196
    %597 = vmatpush.msra.mxu0 %v188
    %598 = vmatpush.msra.mxu0 %v180
    %599 = vmatpush.msra.mxu0 %v172
    %600 = vmatpush.msra.mxu0 %v164
    %601 = vmatmul.f32.gmra.mxu0 %v28
    %v602 = vpop.f32.mrf.mxu0
    %v603 = vadd.f32 %v583, %v602
    %604 = vdwg.mxu0
    %605 = vst [vmem:[%s2] sm:$0xff] %v323
    %606 = vst [vmem:[%s2 + $0x8] sm:$0xff] %v363
    %607 = vst [vmem:[%s2 + $0x10] sm:$0xff] %v403
    %608 = vst [vmem:[%s2 + $0x18] sm:$0xff] %v443
    %609 = vst [vmem:[%s2 + $0x20] sm:$0xff] %v483
    %610 = vst [vmem:[%s2 + $0x28] sm:$0xff] %v523
    %611 = vst [vmem:[%s2 + $0x30] sm:$0xff] %v563
    %612 = vst [vmem:[%s2 + $0x38] sm:$0xff] %v603
    // Predicated region
    $region14: #{upsample.1} parent=1 // pred_check
      _
    $region15: #{upsample.1} parent=1 // pred_check_branch
      %614 = sbr.rel (0) target = $region17
    $region16: #{upsample.1} parent=1 // pred_region
      _
    $region17: #{upsample.1} parent=1 // pred_fallthru
      _
    // Predicated region
    $region18: #{upsample.1} parent=1 // pred_check
      _
    $region19: #{upsample.1} parent=1 // pred_check_branch
      %616 = sbr.rel (0) target = $region21
    $region20: #{upsample.1} parent=1 // pred_region
      _
    $region21: #{upsample.1} parent=1 // pred_fallthru
      _
    %617 = vsyncpa [#allocation3], 1

</llo_original>
